<compile_context>
chip_gen: v7x
topology: tpu7x:2x2x1
jax: 0.10.0
libtpu: 0.0.40
codegen_flags: <defaults>
</compile_context>

<pallas_src>
import functools
import math

import jax
import jax.numpy as jnp
from jax import lax
from jax.experimental import pallas as pl
from jax.experimental.pallas import tpu as pltpu


# --------------------------------------------------------------------------- #
# In-kernel helpers for interleaved (re, im) lane pairs
# --------------------------------------------------------------------------- #
def _pair_masks(rows, chunk):
    """Lane helpers for interleaved (re, im) pairs along the lane axis.

    Returns (even, use_roll1):
      even      -- marks the "real" lanes (lane index even).
      use_roll1 -- per lane, whether roll(x, 1) (vs roll(x, chunk-1)) yields the
                   partner lane i ^ 1.  Derived from a rolled iota so it is
                   correct regardless of the roll direction convention.
    """
    idx = lax.broadcasted_iota(jnp.int32, (rows, chunk), 1)
    even = (idx & 1) == 0
    partner_idx = jnp.bitwise_xor(idx, 1)
    use_roll1 = pltpu.roll(idx, shift=1, axis=1) == partner_idx
    return even, use_roll1


def _partner(y, use_roll1, chunk):
    """y[..., i ^ 1]: the squared partner component of each lane's pair."""
    return jnp.where(use_roll1,
                     pltpu.roll(y, shift=1, axis=1),
                     pltpu.roll(y, shift=chunk - 1, axis=1))


# --------------------------------------------------------------------------- #
# Pass 1: per-channel-row lane-partial sum(|z|) and sum(|z|^2)
# --------------------------------------------------------------------------- #
def _stats_kernel(x_ref, s1_ref, s2_ref, *, chunk, n_chunks):
    rows = x_ref.shape[0]

    @pl.when(jnp.logical_and(pl.program_id(0) == 0, pl.program_id(1) == 0))
    def _init():
        s1_ref[...] = jnp.zeros_like(s1_ref)
        s2_ref[...] = jnp.zeros_like(s2_ref)

    even, use_roll1 = _pair_masks(rows, chunk)

    def body(j, carry):
        lo = pl.multiple_of(j * chunk, chunk)
        x = x_ref[:, pl.ds(lo, chunk)].astype(jnp.float32)
        y = x * x                                    # re^2 / im^2, interleaved
        magsq = y + _partner(y, use_roll1, chunk)    # |z|^2 on both lanes of a pair
        # |z| counted once per pair (real lane); sum(y) already counts |z|^2 once.
        s1_ref[...] += jnp.where(even, jnp.sqrt(magsq), 0.0)
        s2_ref[...] += y
        return carry

    lax.fori_loop(0, n_chunks, body, 0)


# --------------------------------------------------------------------------- #
# Pass 2: out = (re, im) * (a*|z| + c) / |z|   (exact (c, 0) when |z| == 0)
# --------------------------------------------------------------------------- #
def _normalize_kernel(x_ref, a_ref, c_ref, o_ref, *, chunk, n_chunks):
    rows = x_ref.shape[0]
    a = a_ref[...]                                   # [rows, 1]  = weight / std
    c = c_ref[...]                                   # [rows, 1]  = bias + t - mean*a
    even, use_roll1 = _pair_masks(rows, chunk)

    def body(j, carry):
        lo = pl.multiple_of(j * chunk, chunk)
        x = x_ref[:, pl.ds(lo, chunk)].astype(jnp.float32)
        y = x * x
        magsq = y + _partner(y, use_roll1, chunk)
        pos = magsq > 0.0
        inv_mag = lax.rsqrt(jnp.where(pos, magsq, 1.0))   # EUP; no divide, no sqrt
        norm_mag = (magsq * inv_mag) * a + c              # BN(|z|)*w + b + t
        ratio = norm_mag * inv_mag                        # norm_mag / |z|
        out = jnp.where(pos, x * ratio, jnp.where(even, c, 0.0))
        o_ref[:, pl.ds(lo, chunk)] = out.astype(o_ref.dtype)
        return carry

    lax.fori_loop(0, n_chunks, body, 0)


# --------------------------------------------------------------------------- #
# Host-side layout / tiling decisions (all free reshapes, no data movement)
# --------------------------------------------------------------------------- #
def _fold_factor(C, M):
    # Fold part of the lane axis into the sublane axis so rows fill the 8-row
    # sublane group (free contiguous reshape); fall back to no folding.
    k = 8 // math.gcd(C, 8)
    if k > 1 and M % (2 * k) == 0:
        return k
    return 1


def _pick_tile(l_row, rows, max_block_bytes=2 * 1024 * 1024):
    # Largest multiple-of-128 divisor of l_row whose [rows, tile] f32 block fits
    # the per-block budget; fall back to the full row (full-dim exemption).
    if l_row % 128 != 0:
        return l_row
    cap = max(128, (max_block_bytes // (4 * rows)) // 128 * 128)
    best = 128
    for cand in range(128, min(l_row, cap) + 1, 128):
        if l_row % cand == 0:
            best = cand
    return best


def _pick_chunk(tile_l):
    for c in (512, 256, 128):
        if tile_l % c == 0:
            return c
    return tile_l


def radial_norm(x, weight, bias, *, t=5.0, eps=1e-5):
    """x: [N, C, H, W, 2] (NCHW with trailing (real, imag) dim)."""
    N, C, H, W, two = x.shape
    assert two == 2, "last dim must hold (real, imag)"
    M = H * W * 2                      # interleaved lanes per (n, c)
    count = N * H * W                  # elements per channel in the BN reduction

    k = _fold_factor(C, M)
    R = C * k                          # sublane rows per block
    l_row = M // k                     # interleaved lanes per row (always even)
    xr = x.reshape(N, R, l_row)        # FREE contiguous reshape (no transpose)

    tile_l = _pick_tile(l_row, R)
    chunk = _pick_chunk(tile_l)
    n_chunks = tile_l // chunk
    n_tiles = l_row // tile_l

    x_spec = pl.BlockSpec((None, R, tile_l), lambda n, l: (n, 0, l))
    acc_spec = pl.BlockSpec((R, chunk), lambda n, l: (0, 0))

    # ---- pass 1: streamed per-channel sum(|z|), sum(|z|^2) -------------------
    s1p, s2p = pl.pallas_call(
        functools.partial(_stats_kernel, chunk=chunk, n_chunks=n_chunks),
        grid=(N, n_tiles),
        in_specs=[x_spec],
        out_specs=(acc_spec, acc_spec),
        out_shape=(jax.ShapeDtypeStruct((R, chunk), jnp.float32),
                   jax.ShapeDtypeStruct((R, chunk), jnp.float32)),
        compiler_params=pltpu.CompilerParams(
            dimension_semantics=("arbitrary", "arbitrary")),
    )(xr)

    # ---- tiny cross-lane/row reduction + BN coefficient folding (wrapper) ----
    s1 = jnp.sum(s1p.reshape(C, k * chunk), axis=1)
    s2 = jnp.sum(s2p.reshape(C, k * chunk), axis=1)
    cnt = jnp.float32(count)
    mean = s1 / cnt
    var = jnp.maximum(s2 / cnt - mean * mean, 0.0)    # biased (training) variance
    a = weight.astype(jnp.float32) * lax.rsqrt(var + jnp.float32(eps))
    c = bias.astype(jnp.float32) + jnp.float32(t) - mean * a
    a_rows = jnp.repeat(a, k).reshape(R, 1)
    c_rows = jnp.repeat(c, k).reshape(R, 1)

    # ---- pass 2: streamed normalize, writes interleaved (re, im) directly ----
    coef_spec = pl.BlockSpec((R, 1), lambda n, l: (0, 0))
    out = pl.pallas_call(
        functools.partial(_normalize_kernel, chunk=chunk, n_chunks=n_chunks),
        grid=(N, n_tiles),
        in_specs=[x_spec, coef_spec, coef_spec],
        out_specs=x_spec,
        out_shape=jax.ShapeDtypeStruct((N, R, l_row), x.dtype),
        compiler_params=pltpu.CompilerParams(
            dimension_semantics=("parallel", "parallel")),
    )(xr, a_rows, c_rows)

    # TODO(synk): running_mean / running_var buffer updates (momentum, unbiased
    # variance) of the stateful BatchNorm are not reproduced; this is the
    # training-mode forward normalization only.
    return out.reshape(N, C, H, W, 2)


# --------------------------------------------------------------------------- #
# Pure-JAX reference (for correctness verification)
# --------------------------------------------------------------------------- #
def _radial_norm_reference(x, weight, bias, *, t=5.0, eps=1e-5):
    re, im = x[..., 0], x[..., 1]
    mag = jnp.sqrt(re * re + im * im)
    mean = jnp.mean(mag, axis=(0, 2, 3), keepdims=True)
    var = jnp.mean(jnp.square(mag - mean), axis=(0, 2, 3), keepdims=True)
    w = weight[None, :, None, None]
    b = bias[None, :, None, None]
    norm_mag = (mag - mean) / jnp.sqrt(var + eps) * w + b + t
    phase = jnp.arctan2(im, re)
    return jnp.stack((norm_mag * jnp.cos(phase), norm_mag * jnp.sin(phase)),
                     axis=-1)


if __name__ == "__main__":
    key = jax.random.PRNGKey(0)
    N, C, H, W = 2, 4, 16, 16
    x = jax.random.normal(key, (N, C, H, W, 2), dtype=jnp.float32)

    # BatchNorm2d affine params at their deterministic default init.
    weight = jnp.ones((C,), dtype=jnp.float32)
    bias = jnp.zeros((C,), dtype=jnp.float32)

    fn = jax.jit(functools.partial(radial_norm, t=5.0, eps=1e-5))
    out = jax.block_until_ready(fn(x, weight, bias))
    assert out.shape == (N, C, H, W, 2)

    ref = _radial_norm_reference(x, weight, bias, t=5.0, eps=1e-5)
    max_err = float(jnp.max(jnp.abs(out - ref)))
    assert jnp.allclose(out, ref, atol=1e-4, rtol=1e-4), f"max_err={max_err}"
    print("KERNEL_OK")
</pallas_src>

<mosaic_0001>
module attributes {stable_mosaic.version = 11 : i64} {
  func.func @_stats_kernel(%arg0: i32, %arg1: i32, %arg2: memref<1x8x256xf32, #tpu.memory_space<vmem>>, %arg3: memref<8x256xf32, #tpu.memory_space<vmem>>, %arg4: memref<8x256xf32, #tpu.memory_space<vmem>>) attributes {dimension_semantics = [#tpu.dimension_semantics<arbitrary>, #tpu.dimension_semantics<arbitrary>], iteration_bounds = array<i64: 2, 1>, scalar_prefetch = 0 : i64, scratch_operands = 0 : i64, tpu.core_type = #tpu.core_type<tc>, window_params = [{transform_indices = @transform_0, window_bounds = array<i64: 1, 8, 256>}, {pipeline_mode = #tpu.pipeline_mode<synchronous>, transform_indices = @transform_1, window_bounds = array<i64: 8, 256>}, {pipeline_mode = #tpu.pipeline_mode<synchronous>, transform_indices = @transform_2, window_bounds = array<i64: 8, 256>}]} {
    %c0_i32 = arith.constant 0 : i32
    %0 = arith.cmpi eq, %arg0, %c0_i32 : i32
    %c0_i32_0 = arith.constant 0 : i32
    %1 = arith.cmpi eq, %arg1, %c0_i32_0 : i32
    %2 = arith.andi %0, %1 : i1
    %3 = arith.extui %2 : i1 to i32
    %c0_i32_1 = arith.constant 0 : i32
    %4 = arith.cmpi ne, %3, %c0_i32_1 : i32
    scf.if %4 {
      %cst_17 = arith.constant 0.000000e+00 : f32
      %33 = vector.broadcast %cst_17 : f32 to vector<8x256xf32>
      %c0_18 = arith.constant 0 : index
      %c0_19 = arith.constant 0 : index
      %34 = vector.load %arg3[%c0_18, %c0_19] : memref<8x256xf32, #tpu.memory_space<vmem>>, vector<8x256xf32>
      tpu.vector_store %arg3[%c0_18, %c0_19], %33 {strides = array<i32>} : memref<8x256xf32, #tpu.memory_space<vmem>>, vector<8x256xf32>,
      %cst_20 = arith.constant 0.000000e+00 : f32
      %35 = vector.broadcast %cst_20 : f32 to vector<8x256xf32>
      %c0_21 = arith.constant 0 : index
      %c0_22 = arith.constant 0 : index
      %36 = vector.load %arg4[%c0_21, %c0_22] : memref<8x256xf32, #tpu.memory_space<vmem>>, vector<8x256xf32>
      tpu.vector_store %arg4[%c0_21, %c0_22], %35 {strides = array<i32>} : memref<8x256xf32, #tpu.memory_space<vmem>>, vector<8x256xf32>,
    } else {
    }
    %5 = tpu.iota {dimensions = array<i32: 1>} : vector<8x256xi32>
    %c1_i32 = arith.constant 1 : i32
    %6 = vector.broadcast %c1_i32 : i32 to vector<8x256xi32>
    %7 = arith.andi %5, %6 : vector<8x256xi32>
    %c0_i32_2 = arith.constant 0 : i32
    %8 = vector.broadcast %c0_i32_2 : i32 to vector<8x256xi32>
    %9 = arith.cmpi eq, %7, %8 : vector<8x256xi32>
    %c1_i32_3 = arith.constant 1 : i32
    %10 = vector.broadcast %c1_i32_3 : i32 to vector<8x256xi32>
    %11 = arith.xori %5, %10 : vector<8x256xi32>
    %c1_i32_4 = arith.constant 1 : i32
    %12 = tpu.dynamic_rotate %5 by %c1_i32_4 dim 1 : vector<8x256xi32>, i32 -> vector<8x256xi32>
    %13 = arith.cmpi eq, %12, %11 : vector<8x256xi32>
    %c0_i32_5 = arith.constant 0 : i32
    %c256_i32 = arith.constant 256 : i32
    %14 = arith.muli %c0_i32_5, %c256_i32 : i32
    %15 = tpu.assume_multiple %14, 256 : i32
    %c0 = arith.constant 0 : index
    %c0_6 = arith.constant 0 : index
    %16 = arith.index_cast %15 : i32 to index
    %17 = vector.load %arg2[%c0, %c0_6, %16] : memref<1x8x256xf32, #tpu.memory_space<vmem>>, vector<1x8x256xf32>
    %18 = vector.shape_cast %17 : vector<1x8x256xf32> to vector<8x256xf32>
    %19 = arith.mulf %18, %18 : vector<8x256xf32>
    %c1_i32_7 = arith.constant 1 : i32
    %20 = tpu.dynamic_rotate %19 by %c1_i32_7 dim 1 : vector<8x256xf32>, i32 -> vector<8x256xf32>
    %c255_i32 = arith.constant 255 : i32
    %21 = tpu.dynamic_rotate %19 by %c255_i32 dim 1 : vector<8x256xf32>, i32 -> vector<8x256xf32>
    %22 = arith.select %13, %20, %21 : vector<8x256xi1>, vector<8x256xf32>
    %23 = arith.addf %19, %22 : vector<8x256xf32>
    %c0_8 = arith.constant 0 : index
    %c0_9 = arith.constant 0 : index
    %24 = vector.load %arg3[%c0_8, %c0_9] : memref<8x256xf32, #tpu.memory_space<vmem>>, vector<8x256xf32>
    %25 = math.sqrt %23 : vector<8x256xf32>
    %cst = arith.constant 0.000000e+00 : f32
    %26 = vector.broadcast %cst : f32 to vector<8x256xf32>
    %27 = arith.select %9, %25, %26 : vector<8x256xi1>, vector<8x256xf32>
    %28 = arith.addf %24, %27 : vector<8x256xf32>
    %c0_10 = arith.constant 0 : index
    %c0_11 = arith.constant 0 : index
    %29 = vector.load %arg3[%c0_10, %c0_11] : memref<8x256xf32, #tpu.memory_space<vmem>>, vector<8x256xf32>
    tpu.vector_store %arg3[%c0_10, %c0_11], %28 {strides = array<i32>} : memref<8x256xf32, #tpu.memory_space<vmem>>, vector<8x256xf32>,
    %c0_12 = arith.constant 0 : index
    %c0_13 = arith.constant 0 : index
    %30 = vector.load %arg4[%c0_12, %c0_13] : memref<8x256xf32, #tpu.memory_space<vmem>>, vector<8x256xf32>
    %31 = arith.addf %30, %19 : vector<8x256xf32>
    %c0_14 = arith.constant 0 : index
    %c0_15 = arith.constant 0 : index
    %32 = vector.load %arg4[%c0_14, %c0_15] : memref<8x256xf32, #tpu.memory_space<vmem>>, vector<8x256xf32>
    tpu.vector_store %arg4[%c0_14, %c0_15], %31 {strides = array<i32>} : memref<8x256xf32, #tpu.memory_space<vmem>>, vector<8x256xf32>,
    %c1_i32_16 = arith.constant 1 : i32
    return
  }
  func.func @transform_0(%arg0: i32, %arg1: i32) -> (i32, i32, i32) {
    %c0_i32 = arith.constant 0 : i32
    %c0_i32_0 = arith.constant 0 : i32
    return %arg0, %c0_i32, %arg1 : i32, i32, i32
  }
  func.func @transform_1(%arg0: i32, %arg1: i32) -> (i32, i32) {
    %c0_i32 = arith.constant 0 : i32
    %c0_i32_0 = arith.constant 0 : i32
    %c0_i32_1 = arith.constant 0 : i32
    return %c0_i32, %c0_i32_0 : i32, i32
  }
  func.func @transform_2(%arg0: i32, %arg1: i32) -> (i32, i32) {
    %c0_i32 = arith.constant 0 : i32
    %c0_i32_0 = arith.constant 0 : i32
    %c0_i32_1 = arith.constant 0 : i32
    return %c0_i32, %c0_i32_0 : i32, i32
  }
}

module attributes {stable_mosaic.version = 11 : i64} {
  func.func @_normalize_kernel(%arg0: i32, %arg1: i32, %arg2: memref<1x8x256xf32, #tpu.memory_space<vmem>>, %arg3: memref<8x1xf32, #tpu.memory_space<vmem>>, %arg4: memref<8x1xf32, #tpu.memory_space<vmem>>, %arg5: memref<1x8x256xf32, #tpu.memory_space<vmem>>) attributes {dimension_semantics = [#tpu.dimension_semantics<parallel>, #tpu.dimension_semantics<parallel>], iteration_bounds = array<i64: 2, 1>, scalar_prefetch = 0 : i64, scratch_operands = 0 : i64, tpu.core_type = #tpu.core_type<tc>, window_params = [{transform_indices = @transform_0, window_bounds = array<i64: 1, 8, 256>}, {pipeline_mode = #tpu.pipeline_mode<synchronous>, transform_indices = @transform_1, window_bounds = array<i64: 8, 1>}, {pipeline_mode = #tpu.pipeline_mode<synchronous>, transform_indices = @transform_2, window_bounds = array<i64: 8, 1>}, {transform_indices = @transform_3, window_bounds = array<i64: 1, 8, 256>}]} {
    %c0 = arith.constant 0 : index
    %c0_0 = arith.constant 0 : index
    %0 = vector.load %arg3[%c0, %c0_0] : memref<8x1xf32, #tpu.memory_space<vmem>>, vector<8x1xf32>
    %c0_1 = arith.constant 0 : index
    %c0_2 = arith.constant 0 : index
    %1 = vector.load %arg4[%c0_1, %c0_2] : memref<8x1xf32, #tpu.memory_space<vmem>>, vector<8x1xf32>
    %2 = tpu.iota {dimensions = array<i32: 1>} : vector<8x256xi32>
    %c1_i32 = arith.constant 1 : i32
    %3 = vector.broadcast %c1_i32 : i32 to vector<8x256xi32>
    %4 = arith.andi %2, %3 : vector<8x256xi32>
    %c0_i32 = arith.constant 0 : i32
    %5 = vector.broadcast %c0_i32 : i32 to vector<8x256xi32>
    %6 = arith.cmpi eq, %4, %5 : vector<8x256xi32>
    %c1_i32_3 = arith.constant 1 : i32
    %7 = vector.broadcast %c1_i32_3 : i32 to vector<8x256xi32>
    %8 = arith.xori %2, %7 : vector<8x256xi32>
    %c1_i32_4 = arith.constant 1 : i32
    %9 = tpu.dynamic_rotate %2 by %c1_i32_4 dim 1 : vector<8x256xi32>, i32 -> vector<8x256xi32>
    %10 = arith.cmpi eq, %9, %8 : vector<8x256xi32>
    %c0_i32_5 = arith.constant 0 : i32
    %c256_i32 = arith.constant 256 : i32
    %11 = arith.muli %c0_i32_5, %c256_i32 : i32
    %12 = tpu.assume_multiple %11, 256 : i32
    %c0_6 = arith.constant 0 : index
    %c0_7 = arith.constant 0 : index
    %13 = arith.index_cast %12 : i32 to index
    %14 = vector.load %arg2[%c0_6, %c0_7, %13] : memref<1x8x256xf32, #tpu.memory_space<vmem>>, vector<1x8x256xf32>
    %15 = vector.shape_cast %14 : vector<1x8x256xf32> to vector<8x256xf32>
    %16 = arith.mulf %15, %15 : vector<8x256xf32>
    %c1_i32_8 = arith.constant 1 : i32
    %17 = tpu.dynamic_rotate %16 by %c1_i32_8 dim 1 : vector<8x256xf32>, i32 -> vector<8x256xf32>
    %c255_i32 = arith.constant 255 : i32
    %18 = tpu.dynamic_rotate %16 by %c255_i32 dim 1 : vector<8x256xf32>, i32 -> vector<8x256xf32>
    %19 = arith.select %10, %17, %18 : vector<8x256xi1>, vector<8x256xf32>
    %20 = arith.addf %16, %19 : vector<8x256xf32>
    %cst = arith.constant 0.000000e+00 : f32
    %21 = vector.broadcast %cst : f32 to vector<8x256xf32>
    %22 = arith.cmpf ogt, %20, %21 : vector<8x256xf32>
    %cst_9 = arith.constant 1.000000e+00 : f32
    %23 = vector.broadcast %cst_9 : f32 to vector<8x256xf32>
    %24 = arith.select %22, %20, %23 : vector<8x256xi1>, vector<8x256xf32>
    %25 = math.rsqrt %24 : vector<8x256xf32>
    %26 = arith.mulf %20, %25 : vector<8x256xf32>
    %27 = vector.broadcast %0 : vector<8x1xf32> to vector<8x256xf32>
    %28 = arith.mulf %26, %27 : vector<8x256xf32>
    %29 = vector.broadcast %1 : vector<8x1xf32> to vector<8x256xf32>
    %30 = arith.addf %28, %29 : vector<8x256xf32>
    %31 = arith.mulf %30, %25 : vector<8x256xf32>
    %32 = arith.mulf %15, %31 : vector<8x256xf32>
    %cst_10 = arith.constant 0.000000e+00 : f32
    %33 = vector.shape_cast %1 : vector<8x1xf32> to vector<8x1xf32>
    %34 = vector.broadcast %33 : vector<8x1xf32> to vector<8x256xf32>
    %35 = vector.broadcast %cst_10 : f32 to vector<8x256xf32>
    %36 = arith.select %6, %34, %35 : vector<8x256xi1>, vector<8x256xf32>
    %37 = arith.select %22, %32, %36 : vector<8x256xi1>, vector<8x256xf32>
    %c0_11 = arith.constant 0 : index
    %c0_12 = arith.constant 0 : index
    %38 = arith.index_cast %12 : i32 to index
    %39 = vector.load %arg5[%c0_11, %c0_12, %38] : memref<1x8x256xf32, #tpu.memory_space<vmem>>, vector<1x8x256xf32>
    %40 = vector.shape_cast %39 : vector<1x8x256xf32> to vector<8x256xf32>
    %41 = vector.shape_cast %37 : vector<8x256xf32> to vector<1x8x256xf32>
    tpu.vector_store %arg5[%c0_11, %c0_12, %38], %41 {strides = array<i32>} : memref<1x8x256xf32, #tpu.memory_space<vmem>>, vector<1x8x256xf32>,
    %c1_i32_13 = arith.constant 1 : i32
    return
  }
  func.func @transform_0(%arg0: i32, %arg1: i32) -> (i32, i32, i32) {
    %c0_i32 = arith.constant 0 : i32
    %c0_i32_0 = arith.constant 0 : i32
    return %arg0, %c0_i32, %arg1 : i32, i32, i32
  }
  func.func @transform_1(%arg0: i32, %arg1: i32) -> (i32, i32) {
    %c0_i32 = arith.constant 0 : i32
    %c0_i32_0 = arith.constant 0 : i32
    %c0_i32_1 = arith.constant 0 : i32
    return %c0_i32, %c0_i32_0 : i32, i32
  }
  func.func @transform_2(%arg0: i32, %arg1: i32) -> (i32, i32) {
    %c0_i32 = arith.constant 0 : i32
    %c0_i32_0 = arith.constant 0 : i32
    %c0_i32_1 = arith.constant 0 : i32
    return %c0_i32, %c0_i32_0 : i32, i32
  }
  func.func @transform_3(%arg0: i32, %arg1: i32) -> (i32, i32, i32) {
    %c0_i32 = arith.constant 0 : i32
    %c0_i32_0 = arith.constant 0 : i32
    return %arg0, %c0_i32, %arg1 : i32, i32, i32
  }
}

</mosaic_0001>

<llo_original>
// kernel: radial_norm.2
$region0: #{radial_norm.2}
  #allocation0 [shape = 'u32[]', space=smem, size = 0x4, offset = 0x4, fixed_abs, tag = 'smem constant byte address 0x4 - core index']
  #allocation1 [shape = 'u32[144,128]{1,0:T(1,128)}', space=vmem, size = 0x12000, scoped, tag = 'internal scratch']
  %s0 = inlined_call_operand.vmem [shape: f32[2,8,256], index: 0, kind: input, shape index: {}]
  %s1 = inlined_call_operand.vmem [shape: f32[8,256], index: 1, kind: output, shape index: {0}]
  %s2 = inlined_call_operand.vmem [shape: f32[8,256], index: 2, kind: output, shape index: {1}]
  %3 = xla_tuple %s1, %s2
  %s4 = sld [smem:[#allocation0]]
  $region49: #{radial_norm.2} parent=0
    _
  %s6 = ssub.s32 1, %s4
  %s7 = scalar_select 0, %s6, %s4
  loop: start=0, step=1, limit=4
  $region2: #{radial_norm.2} parent=0 // loop_pre_header
    _
  $region3: #{radial_norm.2} parent=0 // loop_header
    %s9 = sphi 0, %s13
    %p10 = scmp.ge.s32.totalorder %s9, 4
    %s16 = sphi 0, %s28
    %s17 = sphi 0, %s24
    %s18 = sphi 0, %s16
    %s19 = sphi 0, %s17
    %s20 = sphi 0, %s18
    %s21 = sphi 0, %s19
    %s33 = sphi 0, %s35
    %s36 = sphi 0, %s33
    %s37 = sphi 0, %s36
    %s53 = sphi 0, %s37
    %s57 = sphi 0, %s57
    %s59 = sphi 0, %s57
    %s60 = sphi 0, %s59
    %s74 = sphi 0, %s60
    %s78 = sphi 0, %s78
    %s80 = sphi 0, %s78
    %s81 = sphi 0, %s80
    %s95 = sphi 0, %s81
  $region4: #{radial_norm.2} parent=0 // loop_header_branch
    %12 = sbr.rel (%p10) target = $region8
  $region5: #{radial_norm.2} parent=0 // loop_body
    %s14 = ssub.s32 %s9, 1
    %s15 = ssub.s32 %s9, 2
    %s22 = sadd.s32 1, %s17
    %p23 = scmp.ge.s32.totalorder %s22, 1
    %s24 = scalar_select %p23, 0, %s22
    %s25 = sadd.s32 1, %s16
    %s26 = scalar_select %p23, %s25, %s16
    %p27 = scmp.ge.s32.totalorder %s26, 2
    %s28 = scalar_select %p27, 0, %s26
    %s29 = ssub.s32 %s16, %s28
    %s30 = ssub.s32 %s17, %s24
    %s31 = sor.u32 %s29, %s30
    %p32 = scmp.eq.s32.totalorder %s31, 0
    %s34 = sadd.s32 %s33, 1
    %s35 = scalar_select %p32, %s33, %s34
    %p38 = pneg %p32
    %p39 = scmp.eq.s32.totalorder %s9, 1
    %p40 = por %p38, %p39
    %p41 = scmp.ne.s32.totalorder %s33, %s36
    %p42 = scmp.eq.s32.totalorder %s9, 0
    %p43 = por %p41, %p42
    %p44 = scmp.ne.s32.totalorder %s33, %s36
    %p45 = scmp.eq.s32.totalorder %s14, 1
    %p46 = por %p44, %p45
    %p47 = scmp.ne.s32.totalorder %s36, %s37
    %p48 = scmp.eq.s32.totalorder %s14, 0
    %p49 = por %p47, %p48
    %p50 = scmp.ne.s32.totalorder %s36, %s37
    %p51 = scmp.eq.s32.totalorder %s15, 1
    %p52 = por %p50, %p51
    %p54 = scmp.ne.s32.totalorder %s37, %s53
    %p55 = scmp.eq.s32.totalorder %s15, 0
    %p56 = por %p54, %p55
    %s58 = sadd.s32 %s57, 1
    %p61 = scmp.eq.s32.totalorder %s9, 1
    %p62 = scmp.ne.s32.totalorder %s57, %s59
    %p63 = scmp.eq.s32.totalorder %s9, 0
    %p64 = por %p62, %p63
    %p65 = scmp.ne.s32.totalorder %s57, %s59
    %p66 = scmp.eq.s32.totalorder %s14, 1
    %p67 = por %p65, %p66
    %p68 = scmp.ne.s32.totalorder %s59, %s60
    %p69 = scmp.eq.s32.totalorder %s14, 0
    %p70 = por %p68, %p69
    %p71 = scmp.ne.s32.totalorder %s59, %s60
    %p72 = scmp.eq.s32.totalorder %s15, 1
    %p73 = por %p71, %p72
    %p75 = scmp.ne.s32.totalorder %s60, %s74
    %p76 = scmp.eq.s32.totalorder %s15, 0
    %p77 = por %p75, %p76
    %s79 = sadd.s32 %s78, 1
    %p82 = scmp.eq.s32.totalorder %s9, 1
    %p83 = scmp.ne.s32.totalorder %s78, %s80
    %p84 = scmp.eq.s32.totalorder %s9, 0
    %p85 = por %p83, %p84
    %p86 = scmp.ne.s32.totalorder %s78, %s80
    %p87 = scmp.eq.s32.totalorder %s14, 1
    %p88 = por %p86, %p87
    %p89 = scmp.ne.s32.totalorder %s80, %s81
    %p90 = scmp.eq.s32.totalorder %s14, 0
    %p91 = por %p89, %p90
    %p92 = scmp.ne.s32.totalorder %s80, %s81
    %p93 = scmp.eq.s32.totalorder %s15, 1
    %p94 = por %p92, %p93
    %p96 = scmp.ne.s32.totalorder %s81, %s95
    %p97 = scmp.eq.s32.totalorder %s15, 0
    %p98 = por %p96, %p97
    %p99 = scmp.le.s32.totalorder 1, %s9
    %p100 = scmp.lt.s32.totalorder %s9, 3
    %p101 = pnand %p99, %p100
    %p102 = pneg %p101
    // Predicated region
    $region9: #{radial_norm.2} parent=5 // pred_check
      _
    $region10: #{radial_norm.2} parent=5 // pred_check_branch
      %104 = sbr.rel (%p101) target = $region12
    $region11: #{radial_norm.2} parent=5 // pred_region
      %s105 = ssub.s32 %s9, 1
    $region12: #{radial_norm.2} parent=5 // pred_fallthru
      _
    %p106 = scmp.lt.s32.totalorder %s9, 2
    // Predicated region
    $region13: #{radial_norm.2} parent=5 // pred_check
      %p107 = pneg %p106
    $region14: #{radial_norm.2} parent=5 // pred_check_branch
      %109 = sbr.rel (%p107) target = $region16
    $region15: #{radial_norm.2} parent=5 // pred_region
      // Predicated region
      $region17: #{radial_norm.2} parent=15 // pred_check
        %p110 = pneg %p43
      $region18: #{radial_norm.2} parent=15 // pred_check_branch
        %112 = sbr.rel (%p110) target = $region20
      $region19: #{radial_norm.2} parent=15 // pred_region
        %s113 = smul.u32 2, %s17
        %p114 = scmp.lt.s32.totalorder %s16, 1
        %s115 = scalar_select %p114, %s16, 1
        %p116 = scmp.lt.s32.totalorder %s113, 1
        %s117 = scalar_select %p116, %s113, 1
        %s118 = smul.addr %s115, 2
        %s119 = sadd.s32 %s117, %s118
        %s120 = smul.addr %s119, 8
        %s121 = scalar_lea.vmem %s0, %s120
        %s122 = smul.u32 2, %s17
      $region20: #{radial_norm.2} parent=15 // pred_fallthru
        _
    $region16: #{radial_norm.2} parent=5 // pred_fallthru
      _
    %p123 = scmp.le.s32.totalorder 1, %s9
    %p124 = scmp.lt.s32.totalorder %s9, 3
    %p125 = pnand %p123, %p124
    %p126 = pneg %p125
    // Predicated region
    $region21: #{radial_norm.2} parent=5 // pred_check
      _
    $region22: #{radial_norm.2} parent=5 // pred_check_branch
      %128 = sbr.rel (%p125) target = $region24
    $region23: #{radial_norm.2} parent=5 // pred_region
      %s129 = ssub.s32 %s9, 1
      %s130 = smul.u32 2, %s19
      %p131 = scmp.lt.s32.totalorder %s18, 1
      %s132 = scalar_select %p131, %s18, 1
      %p133 = scmp.lt.s32.totalorder %s130, 1
      %s134 = scalar_select %p133, %s130, 1
      %s135 = smul.addr %s132, 2
      %s136 = sadd.s32 %s134, %s135
      %s137 = smul.addr %s136, 8
      %s138 = scalar_lea.vmem %s0, %s137
      %p139 = pneg %p49
      %p140 = pneg %p46
      %p141 = pneg %p70
      %p142 = pneg %p67
      %p143 = pneg %p91
      %p144 = pneg %p88
      %s145 = smul.u32 2, %s19
      %p146 = scmp.lt.s32.totalorder %s18, 1
      %s147 = scalar_select %p146, %s18, 1
      %p148 = scmp.lt.s32.totalorder %s145, 1
      %s149 = scalar_select %p148, %s145, 1
      %s150 = smul.addr %s147, 2
      %s151 = sadd.s32 %s149, %s150
      %s152 = smul.addr %s151, 8
      %s153 = scalar_lea.vmem %s0, %s152
      %s154 = smul.u32 2, %s19
      %p155 = scmp.eq.s32.totalorder %s18, 0
      %p156 = scmp.eq.s32.totalorder %s19, 0
      %p157 = pnand %p155, %p156
      %p158 = pneg %p157
      // Predicated region
      $region25: #{radial_norm.2} parent=23 // pred_check
        _
      $region26: #{radial_norm.2} parent=23 // pred_check_branch
        %160 = sbr.rel (%p157) target = $region28
      $region27: #{radial_norm.2} parent=23 // pred_region
        %161 = vst [vmem:[%s1] sm:$0xff] 0.0
        %162 = vst [vmem:[%s1 + $0x8] sm:$0xff] 0.0
        %163 = vst [vmem:[%s2] sm:$0xff] 0.0
        %164 = vst [vmem:[%s2 + $0x8] sm:$0xff] 0.0
      $region28: #{radial_norm.2} parent=23 // pred_fallthru
        _
      %v165 = vlaneseq
      %v166 = vand.u32 %v165, 127
      %v167 = vadd.s32 %v166, 128
      %v168 = vand.u32 %v166, 1
      %v169 = vand.u32 %v167, 1
      %vm170 = vcmp.eq.s32.totalorder %v168, 0
      %vm171 = vcmp.eq.s32.totalorder %v169, 0
      %v172 = vxor.u32 %v166, 1
      %v173 = vxor.u32 %v167, 1
      %174 = vrot.lane.b32.xlu0 %v166, 1
      %v175 = vpop.permute.xlu0 %174
      %176 = vrot.lane.b32.xlu0 %v167, 1
      %v177 = vpop.permute.xlu0 %176
      %vm178 = vcmp.lt.s32.totalorder %v166, 1
      %v179 = vsel %vm178, %v175, %v177
      %v180 = vsel %vm178, %v177, %v175
      %vm181 = vcmp.eq.s32.totalorder %v180, %v172
      %vm182 = vcmp.eq.s32.totalorder %v179, %v173
      %v183 = vld [vmem:[%s153] sm:$0xff]
      %v184 = vld [vmem:[%s153 + $0x8] sm:$0xff]
      %v185 = vmul.f32 %v183, %v183
      %v186 = vmul.f32 %v184, %v184
      %187 = vrot.lane.b32.xlu0 %v185, 1
      %v188 = vpop.permute.xlu0 %187
      %189 = vrot.lane.b32.xlu0 %v186, 1
      %v190 = vpop.permute.xlu0 %189
      %v191 = vsel %vm178, %v188, %v190
      %v192 = vsel %vm178, %v190, %v188
      %193 = vrot.lane.b32.xlu0 %v185, 127
      %v194 = vpop.permute.xlu0 %193
      %195 = vrot.lane.b32.xlu0 %v186, 127
      %v196 = vpop.permute.xlu0 %195
      %vm197 = vcmp.lt.s32.totalorder %v166, 127
      %v198 = vsel %vm197, %v194, %v196
      %v199 = vsel %vm197, %v196, %v194
      %v200 = vsel %vm181, %v192, %v198
      %v201 = vsel %vm182, %v191, %v199
      %v202 = vadd.f32 %v185, %v200
      %v203 = vadd.f32 %v186, %v201
      %v204 = vld [vmem:[%s1] sm:$0xff]
      %v205 = vld [vmem:[%s1 + $0x8] sm:$0xff]
      %v206 = vrsqrt.pop %v202
      %v207 = vmul.f32 %v202, %v206
      %vm208 = vcmp.eq.f32.partialorder %v202, inf
      %v209 = vsel %vm208, %v202, %v207
      %vm210 = vcmp.eq.f32.partialorder %v202, 0.0
      %v211 = vand.u32 %v202, 2147483648
      %v212 = vsel %vm210, %v211, %v209
      %v213 = vrsqrt.pop %v203
      %v214 = vmul.f32 %v203, %v213
      %vm215 = vcmp.eq.f32.partialorder %v203, inf
      %v216 = vsel %vm215, %v203, %v214
      %vm217 = vcmp.eq.f32.partialorder %v203, 0.0
      %v218 = vand.u32 %v203, 2147483648
      %v219 = vsel %vm217, %v218, %v216
      %v220 = vsel %vm170, %v212, 0.0
      %v221 = vsel %vm171, %v219, 0.0
      %v222 = vadd.f32 %v204, %v220
      %v223 = vadd.f32 %v205, %v221
      %224 = vst [vmem:[%s1] sm:$0xff] %v222
      %225 = vst [vmem:[%s1 + $0x8] sm:$0xff] %v223
      %v226 = vld [vmem:[%s2] sm:$0xff]
      %v227 = vld [vmem:[%s2 + $0x8] sm:$0xff]
      %v228 = vadd.f32 %v226, %v185
      %v229 = vadd.f32 %v227, %v186
      %230 = vst [vmem:[%s2] sm:$0xff] %v228
      %231 = vst [vmem:[%s2 + $0x8] sm:$0xff] %v229
      // Predicated region
      $region29: #{radial_norm.2} parent=23 // pred_check
        %p232 = pneg %p67
      $region30: #{radial_norm.2} parent=23 // pred_check_branch
        %234 = sbr.rel (%p232) target = $region32
      $region31: #{radial_norm.2} parent=23 // pred_region
        _
      $region32: #{radial_norm.2} parent=23 // pred_fallthru
        _
      // Predicated region
      $region33: #{radial_norm.2} parent=23 // pred_check
        %p235 = pneg %p88
      $region34: #{radial_norm.2} parent=23 // pred_check_branch
        %237 = sbr.rel (%p235) target = $region36
      $region35: #{radial_norm.2} parent=23 // pred_region
        _
      $region36: #{radial_norm.2} parent=23 // pred_fallthru
        _
      // Predicated region
      $region37: #{radial_norm.2} parent=23 // pred_check
        %p238 = pneg %p67
      $region38: #{radial_norm.2} parent=23 // pred_check_branch
        %240 = sbr.rel (%p238) target = $region40
      $region39: #{radial_norm.2} parent=23 // pred_region
        _
      $region40: #{radial_norm.2} parent=23 // pred_fallthru
        _
      // Predicated region
      $region41: #{radial_norm.2} parent=23 // pred_check
        %p241 = pneg %p88
      $region42: #{radial_norm.2} parent=23 // pred_check_branch
        %243 = sbr.rel (%p241) target = $region44
      $region43: #{radial_norm.2} parent=23 // pred_region
        _
      $region44: #{radial_norm.2} parent=23 // pred_fallthru
        _
    $region24: #{radial_norm.2} parent=5 // pred_fallthru
      _
    %p244 = scmp.le.s32.totalorder 2, %s9
    // Predicated region
    $region45: #{radial_norm.2} parent=5 // pred_check
      %p245 = pneg %p244
    $region46: #{radial_norm.2} parent=5 // pred_check_branch
      %247 = sbr.rel (%p245) target = $region48
    $region47: #{radial_norm.2} parent=5 // pred_region
      %s248 = ssub.s32 %s9, 2
    $region48: #{radial_norm.2} parent=5 // pred_fallthru
      _
  $region6: #{radial_norm.2} parent=0 // loop_footer
    %s13 = sadd.s32 1, %s9
  $region7: #{radial_norm.2} parent=0 // loop_footer_branch
    %8 = sbr.rel target = $region3
  $region8: #{radial_norm.2} parent=0 // loop_exit
    _

// kernel: radial_norm.3
$region0: #{radial_norm.3}
  #allocation0 [shape = 'u32[]', space=smem, size = 0x4, offset = 0x4, fixed_abs, tag = 'smem constant byte address 0x4 - core index']
  #allocation1 [shape = 'u32[144,128]{1,0:T(1,128)}', space=vmem, size = 0x12000, scoped, tag = 'internal scratch']
  %s0 = inlined_call_operand.vmem [shape: f32[2,8,256], index: 0, kind: input, shape index: {}]
  %s1 = inlined_call_operand.vmem [shape: f32[8,1], index: 1, kind: input, shape index: {}]
  %s2 = inlined_call_operand.vmem [shape: f32[8,1], index: 2, kind: input, shape index: {}]
  %s3 = inlined_call_operand.vmem [shape: f32[2,8,256], index: 3, kind: output, shape index: {}]
  %s4 = sld [smem:[#allocation0]]
  $region45: #{radial_norm.3} parent=0
    _
  %s6 = ssub.s32 1, %s4
  %s7 = scalar_select 0, %s6, %s4
  loop: start=0, step=1, limit=4
  $region2: #{radial_norm.3} parent=0 // loop_pre_header
    _
  $region3: #{radial_norm.3} parent=0 // loop_header
    %s9 = sphi 0, %s13
    %p10 = scmp.ge.s32.totalorder %s9, 4
    %s16 = sphi 0, %s28
    %s17 = sphi 0, %s24
    %s18 = sphi 0, %s16
    %s19 = sphi 0, %s17
    %s20 = sphi 0, %s18
    %s21 = sphi 0, %s19
    %s33 = sphi 0, %s35
    %s36 = sphi 0, %s33
    %s37 = sphi 0, %s36
    %s53 = sphi 0, %s37
    %s57 = sphi 0, %s57
    %s59 = sphi 0, %s57
    %s60 = sphi 0, %s59
    %s74 = sphi 0, %s60
    %s78 = sphi 0, %s78
    %s80 = sphi 0, %s78
    %s81 = sphi 0, %s80
    %s95 = sphi 0, %s81
    %s103 = sphi 0, %s105
    %s106 = sphi 0, %s103
    %s107 = sphi 0, %s106
    %s123 = sphi 0, %s107
  $region4: #{radial_norm.3} parent=0 // loop_header_branch
    %12 = sbr.rel (%p10) target = $region8
  $region5: #{radial_norm.3} parent=0 // loop_body
    %s14 = ssub.s32 %s9, 1
    %s15 = ssub.s32 %s9, 2
    %s22 = sadd.s32 1, %s17
    %p23 = scmp.ge.s32.totalorder %s22, 1
    %s24 = scalar_select %p23, 0, %s22
    %s25 = sadd.s32 1, %s16
    %s26 = scalar_select %p23, %s25, %s16
    %p27 = scmp.ge.s32.totalorder %s26, 2
    %s28 = scalar_select %p27, 0, %s26
    %s29 = ssub.s32 %s16, %s28
    %s30 = ssub.s32 %s17, %s24
    %s31 = sor.u32 %s29, %s30
    %p32 = scmp.eq.s32.totalorder %s31, 0
    %s34 = sadd.s32 %s33, 1
    %s35 = scalar_select %p32, %s33, %s34
    %p38 = pneg %p32
    %p39 = scmp.eq.s32.totalorder %s9, 1
    %p40 = por %p38, %p39
    %p41 = scmp.ne.s32.totalorder %s33, %s36
    %p42 = scmp.eq.s32.totalorder %s9, 0
    %p43 = por %p41, %p42
    %p44 = scmp.ne.s32.totalorder %s33, %s36
    %p45 = scmp.eq.s32.totalorder %s14, 1
    %p46 = por %p44, %p45
    %p47 = scmp.ne.s32.totalorder %s36, %s37
    %p48 = scmp.eq.s32.totalorder %s14, 0
    %p49 = por %p47, %p48
    %p50 = scmp.ne.s32.totalorder %s36, %s37
    %p51 = scmp.eq.s32.totalorder %s15, 1
    %p52 = por %p50, %p51
    %p54 = scmp.ne.s32.totalorder %s37, %s53
    %p55 = scmp.eq.s32.totalorder %s15, 0
    %p56 = por %p54, %p55
    %s58 = sadd.s32 %s57, 1
    %p61 = scmp.eq.s32.totalorder %s9, 1
    %p62 = scmp.ne.s32.totalorder %s57, %s59
    %p63 = scmp.eq.s32.totalorder %s9, 0
    %p64 = por %p62, %p63
    %p65 = scmp.ne.s32.totalorder %s57, %s59
    %p66 = scmp.eq.s32.totalorder %s14, 1
    %p67 = por %p65, %p66
    %p68 = scmp.ne.s32.totalorder %s59, %s60
    %p69 = scmp.eq.s32.totalorder %s14, 0
    %p70 = por %p68, %p69
    %p71 = scmp.ne.s32.totalorder %s59, %s60
    %p72 = scmp.eq.s32.totalorder %s15, 1
    %p73 = por %p71, %p72
    %p75 = scmp.ne.s32.totalorder %s60, %s74
    %p76 = scmp.eq.s32.totalorder %s15, 0
    %p77 = por %p75, %p76
    %s79 = sadd.s32 %s78, 1
    %p82 = scmp.eq.s32.totalorder %s9, 1
    %p83 = scmp.ne.s32.totalorder %s78, %s80
    %p84 = scmp.eq.s32.totalorder %s9, 0
    %p85 = por %p83, %p84
    %p86 = scmp.ne.s32.totalorder %s78, %s80
    %p87 = scmp.eq.s32.totalorder %s14, 1
    %p88 = por %p86, %p87
    %p89 = scmp.ne.s32.totalorder %s80, %s81
    %p90 = scmp.eq.s32.totalorder %s14, 0
    %p91 = por %p89, %p90
    %p92 = scmp.ne.s32.totalorder %s80, %s81
    %p93 = scmp.eq.s32.totalorder %s15, 1
    %p94 = por %p92, %p93
    %p96 = scmp.ne.s32.totalorder %s81, %s95
    %p97 = scmp.eq.s32.totalorder %s15, 0
    %p98 = por %p96, %p97
    %s99 = ssub.s32 %s16, %s28
    %s100 = ssub.s32 %s17, %s24
    %s101 = sor.u32 %s99, %s100
    %p102 = scmp.eq.s32.totalorder %s101, 0
    %s104 = sadd.s32 %s103, 1
    %s105 = scalar_select %p102, %s103, %s104
    %p108 = pneg %p102
    %p109 = scmp.eq.s32.totalorder %s9, 1
    %p110 = por %p108, %p109
    %p111 = scmp.ne.s32.totalorder %s103, %s106
    %p112 = scmp.eq.s32.totalorder %s9, 0
    %p113 = por %p111, %p112
    %p114 = scmp.ne.s32.totalorder %s103, %s106
    %p115 = scmp.eq.s32.totalorder %s14, 1
    %p116 = por %p114, %p115
    %p117 = scmp.ne.s32.totalorder %s106, %s107
    %p118 = scmp.eq.s32.totalorder %s14, 0
    %p119 = por %p117, %p118
    %p120 = scmp.ne.s32.totalorder %s106, %s107
    %p121 = scmp.eq.s32.totalorder %s15, 1
    %p122 = por %p120, %p121
    %p124 = scmp.ne.s32.totalorder %s107, %s123
    %p125 = scmp.eq.s32.totalorder %s15, 0
    %p126 = por %p124, %p125
    %p127 = scmp.le.s32.totalorder 1, %s9
    %p128 = scmp.lt.s32.totalorder %s9, 3
    %p129 = pnand %p127, %p128
    %p130 = pneg %p129
    // Predicated region
    $region9: #{radial_norm.3} parent=5 // pred_check
      _
    $region10: #{radial_norm.3} parent=5 // pred_check_branch
      %132 = sbr.rel (%p129) target = $region12
    $region11: #{radial_norm.3} parent=5 // pred_region
      %s133 = ssub.s32 %s9, 1
      // Predicated region
      $region13: #{radial_norm.3} parent=11 // pred_check
        %p134 = pneg %p70
      $region14: #{radial_norm.3} parent=11 // pred_check_branch
        %136 = sbr.rel (%p134) target = $region16
      $region15: #{radial_norm.3} parent=11 // pred_region
        _
      $region16: #{radial_norm.3} parent=11 // pred_fallthru
        _
      // Predicated region
      $region17: #{radial_norm.3} parent=11 // pred_check
        %p137 = pneg %p91
      $region18: #{radial_norm.3} parent=11 // pred_check_branch
        %139 = sbr.rel (%p137) target = $region20
      $region19: #{radial_norm.3} parent=11 // pred_region
        _
      $region20: #{radial_norm.3} parent=11 // pred_fallthru
        _
    $region12: #{radial_norm.3} parent=5 // pred_fallthru
      _
    %p140 = scmp.lt.s32.totalorder %s9, 2
    // Predicated region
    $region21: #{radial_norm.3} parent=5 // pred_check
      %p141 = pneg %p140
    $region22: #{radial_norm.3} parent=5 // pred_check_branch
      %143 = sbr.rel (%p141) target = $region24
    $region23: #{radial_norm.3} parent=5 // pred_region
      // Predicated region
      $region25: #{radial_norm.3} parent=23 // pred_check
        %p144 = pneg %p43
      $region26: #{radial_norm.3} parent=23 // pred_check_branch
        %146 = sbr.rel (%p144) target = $region28
      $region27: #{radial_norm.3} parent=23 // pred_region
        %s147 = smul.u32 2, %s17
        %p148 = scmp.lt.s32.totalorder %s16, 1
        %s149 = scalar_select %p148, %s16, 1
        %p150 = scmp.lt.s32.totalorder %s147, 1
        %s151 = scalar_select %p150, %s147, 1
        %s152 = smul.addr %s149, 2
        %s153 = sadd.s32 %s151, %s152
        %s154 = smul.addr %s153, 8
        %s155 = scalar_lea.vmem %s0, %s154
        %s156 = smul.u32 2, %s17
      $region28: #{radial_norm.3} parent=23 // pred_fallthru
        _
    $region24: #{radial_norm.3} parent=5 // pred_fallthru
      _
    %p157 = scmp.le.s32.totalorder 1, %s9
    %p158 = scmp.lt.s32.totalorder %s9, 3
    %p159 = pnand %p157, %p158
    %p160 = pneg %p159
    // Predicated region
    $region29: #{radial_norm.3} parent=5 // pred_check
      _
    $region30: #{radial_norm.3} parent=5 // pred_check_branch
      %162 = sbr.rel (%p159) target = $region32
    $region31: #{radial_norm.3} parent=5 // pred_region
      %s163 = ssub.s32 %s9, 1
      %s164 = smul.u32 2, %s19
      %p165 = scmp.lt.s32.totalorder %s18, 1
      %s166 = scalar_select %p165, %s18, 1
      %p167 = scmp.lt.s32.totalorder %s164, 1
      %s168 = scalar_select %p167, %s164, 1
      %s169 = smul.addr %s166, 2
      %s170 = sadd.s32 %s168, %s169
      %s171 = smul.addr %s170, 8
      %s172 = scalar_lea.vmem %s0, %s171
      %p173 = pneg %p49
      %p174 = pneg %p46
      %p175 = pneg %p70
      %p176 = pneg %p67
      %p177 = pneg %p91
      %p178 = pneg %p88
      %p179 = pneg %p119
      %p180 = pneg %p116
      %s181 = smul.u32 2, %s19
      %p182 = scmp.lt.s32.totalorder %s18, 1
      %s183 = scalar_select %p182, %s18, 1
      %p184 = scmp.lt.s32.totalorder %s181, 1
      %s185 = scalar_select %p184, %s181, 1
      %s186 = smul.addr %s183, 2
      %s187 = sadd.s32 %s185, %s186
      %s188 = smul.addr %s187, 8
      %s189 = scalar_lea.vmem %s3, %s188
      %s190 = smul.u32 2, %s19
      %p191 = scmp.lt.s32.totalorder %s18, 1
      %s192 = scalar_select %p191, %s18, 1
      %p193 = scmp.lt.s32.totalorder %s190, 1
      %s194 = scalar_select %p193, %s190, 1
      %s195 = smul.addr %s192, 2
      %s196 = sadd.s32 %s194, %s195
      %s197 = smul.addr %s196, 8
      %s198 = scalar_lea.vmem %s0, %s197
      %s199 = smul.u32 2, %s19
      %s200 = smul.u32 2, %s19
      %p201 = scmp.lt.s32.totalorder %s18, 1
      %s202 = scalar_select %p201, %s18, 1
      %p203 = scmp.lt.s32.totalorder %s200, 1
      %s204 = scalar_select %p203, %s200, 1
      %s205 = smul.addr %s202, 2
      %s206 = sadd.s32 %s204, %s205
      %s207 = smul.addr %s206, 8
      %s208 = scalar_lea.vmem %s3, %s207
      %s209 = smul.u32 2, %s19
      %v210 = vld [vmem:[%s1] sm:$0xff]
      %v211 = vld [vmem:[%s2] sm:$0xff]
      %v212 = vlaneseq
      %v213 = vand.u32 %v212, 127
      %v214 = vadd.s32 %v213, 128
      %v215 = vand.u32 %v213, 1
      %v216 = vand.u32 %v214, 1
      %vm217 = vcmp.eq.s32.totalorder %v215, 0
      %vm218 = vcmp.eq.s32.totalorder %v216, 0
      %v219 = vxor.u32 %v213, 1
      %v220 = vxor.u32 %v214, 1
      %221 = vrot.lane.b32.xlu0 %v213, 1
      %v222 = vpop.permute.xlu0 %221
      %223 = vrot.lane.b32.xlu0 %v214, 1
      %v224 = vpop.permute.xlu0 %223
      %vm225 = vcmp.lt.s32.totalorder %v213, 1
      %v226 = vsel %vm225, %v222, %v224
      %v227 = vsel %vm225, %v224, %v222
      %vm228 = vcmp.eq.s32.totalorder %v227, %v219
      %vm229 = vcmp.eq.s32.totalorder %v226, %v220
      %v230 = vld [vmem:[%s198] sm:$0xff]
      %v231 = vld [vmem:[%s198 + $0x8] sm:$0xff]
      %v232 = vmul.f32 %v230, %v230
      %v233 = vmul.f32 %v231, %v231
      %234 = vrot.lane.b32.xlu0 %v232, 1
      %v235 = vpop.permute.xlu0 %234
      %236 = vrot.lane.b32.xlu0 %v233, 1
      %v237 = vpop.permute.xlu0 %236
      %v238 = vsel %vm225, %v235, %v237
      %v239 = vsel %vm225, %v237, %v235
      %240 = vrot.lane.b32.xlu0 %v232, 127
      %v241 = vpop.permute.xlu0 %240
      %242 = vrot.lane.b32.xlu0 %v233, 127
      %v243 = vpop.permute.xlu0 %242
      %vm244 = vcmp.lt.s32.totalorder %v213, 127
      %v245 = vsel %vm244, %v241, %v243
      %v246 = vsel %vm244, %v243, %v241
      %v247 = vsel %vm228, %v239, %v245
      %v248 = vsel %vm229, %v238, %v246
      %v249 = vadd.f32 %v232, %v247
      %v250 = vadd.f32 %v233, %v248
      %vm251 = vcmp.gt.f32.partialorder %v249, 0.0
      %vm252 = vcmp.gt.f32.partialorder %v250, 0.0
      %v253 = vsel %vm251, %v249, 1.0
      %v254 = vsel %vm252, %v250, 1.0
      %v255 = vrsqrt.pop %v253
      %v256 = vrsqrt.pop %v254
      %v257 = vmul.f32 %v249, %v255
      %v258 = vmul.f32 %v250, %v256
      %260 = vset.pattern.permute.xlu0 0
      %261 = vperm.xlu0 %260, %v210
      %v262 = vpop.permute.xlu0 %261
      %v264 = vmul.f32 %v257, %v262
      %v265 = vmul.f32 %v258, %v262
      %267 = vset.pattern.permute.xlu0 0
      %268 = vperm.xlu0 %267, %v211
      %v269 = vpop.permute.xlu0 %268
      %v271 = vadd.f32 %v264, %v269
      %v272 = vadd.f32 %v265, %v269
      %v273 = vmul.f32 %v271, %v255
      %v274 = vmul.f32 %v272, %v256
      %v275 = vmul.f32 %v230, %v273
      %v276 = vmul.f32 %v231, %v274
      %v277 = vsel %vm217, %v269, 0.0
      %v278 = vsel %vm218, %v269, 0.0
      %v279 = vsel %vm251, %v275, %v277
      %v280 = vsel %vm252, %v276, %v278
      %281 = vst [vmem:[%s208] sm:$0xff] %v279
      %282 = vst [vmem:[%s208 + $0x8] sm:$0xff] %v280
      %s283 = smul.u32 2, %s19
      %p284 = scmp.lt.s32.totalorder %s18, 1
      %s285 = scalar_select %p284, %s18, 1
      %p286 = scmp.lt.s32.totalorder %s283, 1
      %s287 = scalar_select %p286, %s283, 1
      %s288 = smul.addr %s285, 2
      %s289 = sadd.s32 %s287, %s288
      %s290 = smul.addr %s289, 8
      %s291 = scalar_lea.vmem %s3, %s290
      // Predicated region
      $region33: #{radial_norm.3} parent=31 // pred_check
        %p292 = pneg %p116
      $region34: #{radial_norm.3} parent=31 // pred_check_branch
        %294 = sbr.rel (%p292) target = $region36
      $region35: #{radial_norm.3} parent=31 // pred_region
        %s295 = smul.u32 2, %s19
      $region36: #{radial_norm.3} parent=31 // pred_fallthru
        _
    $region32: #{radial_norm.3} parent=5 // pred_fallthru
      _
    %p296 = scmp.le.s32.totalorder 2, %s9
    // Predicated region
    $region37: #{radial_norm.3} parent=5 // pred_check
      %p297 = pneg %p296
    $region38: #{radial_norm.3} parent=5 // pred_check_branch
      %299 = sbr.rel (%p297) target = $region40
    $region39: #{radial_norm.3} parent=5 // pred_region
      %s300 = ssub.s32 %s9, 2
      // Predicated region
      $region41: #{radial_norm.3} parent=39 // pred_check
        %p301 = pneg %p122
      $region42: #{radial_norm.3} parent=39 // pred_check_branch
        %303 = sbr.rel (%p301) target = $region44
      $region43: #{radial_norm.3} parent=39 // pred_region
        %s304 = smul.u32 2, %s21
        %p305 = scmp.lt.s32.totalorder %s20, 1
        %s306 = scalar_select %p305, %s20, 1
        %p307 = scmp.lt.s32.totalorder %s304, 1
        %s308 = scalar_select %p307, %s304, 1
        %s309 = smul.addr %s306, 2
        %s310 = sadd.s32 %s308, %s309
        %s311 = smul.addr %s310, 8
        %s312 = scalar_lea.vmem %s3, %s311
      $region44: #{radial_norm.3} parent=39 // pred_fallthru
        _
    $region40: #{radial_norm.3} parent=5 // pred_fallthru
      _
  $region6: #{radial_norm.3} parent=0 // loop_footer
    %s13 = sadd.s32 1, %s9
  $region7: #{radial_norm.3} parent=0 // loop_footer_branch
    %8 = sbr.rel target = $region3
  $region8: #{radial_norm.3} parent=0 // loop_exit
    _

</llo_original>
